<compile_context>
chip_gen: v5e
topology: v5e:2x2
jax: 0.10.0
libtpu: 0.0.40
codegen_flags: <defaults>
</compile_context>

<pallas_src>
import jax
import jax.numpy as jnp
from jax.experimental import pallas as pl
from jax.experimental.pallas import tpu as pltpu


def _round_up(a, m):
    return ((a + m - 1) // m) * m


# ----------------------------------------------------------------------------
# Kernel
# ----------------------------------------------------------------------------
def _conv_bn_relu_kernel(cur_ref, halo_ref, w_ref, shift_ref, o_ref, xstk_ref):
    """Fused Conv1d('same') + affine BN + ReLU for one (batch, L-tile) block.

    cur_ref:   (1, Ci, TL)     current input tile (left-padded coordinates)
    halo_ref:  (1, Ci, HALO)   columns immediately after the current tile
    w_ref:     (Co, ks*Ci)     conv weights with BN scale folded in
    shift_ref: (Co, 1)         folded BN shift (+ conv bias)
    o_ref:     (1, Co, TL)     output tile
    xstk_ref:  (ks*Ci, TL)     VMEM scratch: stacked shifted views of the input
    """
    ci = cur_ref.shape[1]
    ks_ci, tl = xstk_ref.shape
    ks = ks_ci // ci

    # Stack the ks shifted views once:  xstk[k*Ci + c, l] = window[c, l + k]
    # where window = [ cur | first (ks-1) halo columns ].  All slices static.
    for k in range(ks):
        r0, r1 = k * ci, (k + 1) * ci
        xstk_ref[r0:r1, 0:tl - k] = cur_ref[0, :, k:tl].astype(xstk_ref.dtype)
        if k > 0:
            xstk_ref[r0:r1, tl - k:tl] = halo_ref[0, :, 0:k].astype(xstk_ref.dtype)

    # Single MXU matmul over the fused (taps x channels) contraction.
    y = jnp.dot(w_ref[...], xstk_ref[...], preferred_element_type=jnp.float32)
    y = y + shift_ref[...]                       # folded BN shift + conv bias
    o_ref[0] = jnp.maximum(y, 0.0).astype(o_ref.dtype)


# ----------------------------------------------------------------------------
# Wrapper
# ----------------------------------------------------------------------------
def lstm_conv_block_forward(x, weight, bias, gamma, beta, running_mean,
                            running_var, eps=1e-3, *, max_tile=1024,
                            matmul_dtype=None):
    """x: (B, Ci, L); weight: (Co, Ci, ks); returns (B, Co, L)."""
    B, Ci, L = x.shape
    Co, Ci_w, ks = weight.shape
    assert Ci == Ci_w, "channel mismatch"
    assert ks >= 1

    # torch 'same' padding for stride=1, dilation=1 (asymmetric for even ks).
    left = (ks - 1) // 2

    # ---- tile sizing --------------------------------------------------------
    halo = _round_up(max(ks - 1, 1), 128)          # halo width (>= ks-1)
    # Rough per-column VMEM bytes: cur (2x buf) + out (2x buf) + scratch (1x).
    per_col = 4 * (2 * Ci + 2 * Co + ks * Ci)
    tl = (12 * 1024 * 1024) // max(per_col, 1)
    tl = max(128, (tl // 128) * 128)
    tl = min(tl, max_tile, _round_up(L, 128))
    tl = _round_up(max(tl, 128), halo)             # TL multiple of HALO (and 128)

    n_l = -(-L // tl)                              # number of L tiles
    l_out = n_l * tl                               # lane-dense padded output len
    l_pad = l_out + halo                           # padded input length

    # One zero-padded copy of x: 'same' left pad + right pad out to tile+halo.
    x_pad = jnp.pad(x, ((0, 0), (0, 0), (left, l_pad - L - left)))

    # ---- fold BN (eval mode) + conv bias into weights / shift ---------------
    scale = (gamma / jnp.sqrt(running_var + eps)).astype(jnp.float32)      # (Co,)
    shift = (beta + (bias - running_mean) * scale).astype(jnp.float32)
    shift = shift.reshape(Co, 1)
    w_fused = weight.astype(jnp.float32) * scale[:, None, None]            # (Co,Ci,ks)
    w_fused = jnp.transpose(w_fused, (0, 2, 1)).reshape(Co, ks * Ci)       # (Co,ks*Ci)

    op_dtype = jnp.dtype(matmul_dtype) if matmul_dtype is not None else x.dtype
    w_fused = w_fused.astype(op_dtype)

    blocks_per_tile = tl // halo                   # halo-block units per L tile

    out = pl.pallas_call(
        _conv_bn_relu_kernel,
        out_shape=jax.ShapeDtypeStruct((B, Co, l_out), x.dtype),
        grid_spec=pltpu.PrefetchScalarGridSpec(
            num_scalar_prefetch=0,
            grid=(B, n_l),
            in_specs=[
                # current input tile
                pl.BlockSpec((1, Ci, tl), lambda b, j: (b, 0, j)),
                # 128-wide halo starting right after the current tile
                pl.BlockSpec((1, Ci, halo),
                             lambda b, j: (b, 0, (j + 1) * blocks_per_tile)),
                # fused weights (BN scale folded)
                pl.BlockSpec((Co, ks * Ci), lambda b, j: (0, 0)),
                # folded shift
                pl.BlockSpec((Co, 1), lambda b, j: (0, 0)),
            ],
            out_specs=pl.BlockSpec((1, Co, tl), lambda b, j: (b, 0, j)),
            scratch_shapes=[pltpu.VMEM((ks * Ci, tl), op_dtype)],
        ),
        compiler_params=pltpu.CompilerParams(
            dimension_semantics=("parallel", "parallel"),
            vmem_limit_bytes=32 * 1024 * 1024,
        ),
    )(x_pad, x_pad, w_fused, shift)

    return out if l_out == L else out[:, :, :L]


class LSTMConvBlock:
    """JAX/Pallas equivalent of the PyTorch LSTMConvBlock (eval-mode BN)."""

    def __init__(self, ni, no, ks, *, key, dtype=jnp.float32):
        self.ni, self.no, self.ks = ni, no, ks
        self.eps = 1e-3
        k_w, k_b = jax.random.split(key)
        bound = 1.0 / jnp.sqrt(jnp.asarray(ni * ks, jnp.float32))
        self.weight = jax.random.uniform(k_w, (no, ni, ks), dtype,
                                         minval=-bound, maxval=bound)
        self.bias = jax.random.uniform(k_b, (no,), dtype,
                                       minval=-bound, maxval=bound)
        # BatchNorm1d parameters / running stats (PyTorch defaults).
        self.gamma = jnp.ones((no,), dtype)
        self.beta = jnp.zeros((no,), dtype)
        self.running_mean = jnp.zeros((no,), dtype)
        self.running_var = jnp.ones((no,), dtype)

    def __call__(self, x, *, max_tile=1024, matmul_dtype=None):
        return lstm_conv_block_forward(
            x, self.weight, self.bias, self.gamma, self.beta,
            self.running_mean, self.running_var, self.eps,
            max_tile=max_tile, matmul_dtype=matmul_dtype)


# ----------------------------------------------------------------------------
# Pure-JAX reference (independent of the kernel math) for validation.
# ----------------------------------------------------------------------------
def _ref_forward(x, weight, bias, gamma, beta, mean, var, eps=1e-3):
    ks = weight.shape[2]
    left = (ks - 1) // 2
    right = (ks - 1) - left
    z = jax.lax.conv_general_dilated(
        x, weight, window_strides=(1,), padding=[(left, right)],
        dimension_numbers=("NCH", "OIH", "NCH"))
    z = z + bias[None, :, None]
    z = (z - mean[None, :, None]) / jnp.sqrt(var[None, :, None] + eps)
    z = z * gamma[None, :, None] + beta[None, :, None]
    return jnp.maximum(z, 0.0)


def _randomize_bn(blk, key):
    kg, kb, km, kv = jax.random.split(key, 4)
    no = blk.no
    blk.gamma = jax.random.normal(kg, (no,), jnp.float32)
    blk.beta = jax.random.normal(kb, (no,), jnp.float32)
    blk.running_mean = jax.random.normal(km, (no,), jnp.float32) * 0.1
    blk.running_var = jax.random.uniform(kv, (no,), jnp.float32,
                                         minval=0.5, maxval=1.5)


if __name__ == "__main__":
    key = jax.random.PRNGKey(0)
    k0, k1, k2, kx, kp = jax.random.split(key, 5)

    # Case 1: odd kernel size (symmetric 'same' pad), single L tile.
    blk = LSTMConvBlock(ni=4, no=8, ks=5, key=k0)
    _randomize_bn(blk, kp)
    x = jax.random.normal(kx, (2, 4, 16), dtype=jnp.float32)
    y = jax.block_until_ready(blk(x))
    y_ref = _ref_forward(x, blk.weight, blk.bias, blk.gamma, blk.beta,
                         blk.running_mean, blk.running_var, blk.eps)
    assert y.shape == (2, 8, 16)
    assert jnp.allclose(y, y_ref, atol=2e-5, rtol=2e-5), \
        f"case1 mismatch: {jnp.max(jnp.abs(y - y_ref))}"

    # Case 2: even kernel size (asymmetric 'same' pad), different channels.
    blk2 = LSTMConvBlock(ni=3, no=6, ks=4, key=k1)
    x2 = jax.random.normal(jax.random.PRNGKey(2), (2, 3, 20), dtype=jnp.float32)
    y2 = jax.block_until_ready(blk2(x2))
    y2_ref = _ref_forward(x2, blk2.weight, blk2.bias, blk2.gamma, blk2.beta,
                          blk2.running_mean, blk2.running_var, blk2.eps)
    assert y2.shape == (2, 6, 20)
    assert jnp.allclose(y2, y2_ref, atol=2e-5, rtol=2e-5), \
        f"case2 mismatch: {jnp.max(jnp.abs(y2 - y2_ref))}"

    # Case 3: multi-tile L path (forced TL=128) exercising the halo logic and
    # the partial last tile / lane-dense output padding.
    blk3 = LSTMConvBlock(ni=8, no=16, ks=3, key=k2)
    _randomize_bn(blk3, jax.random.PRNGKey(7))
    x3 = jax.random.normal(jax.random.PRNGKey(3), (2, 8, 300), dtype=jnp.float32)
    y3 = jax.block_until_ready(blk3(x3, max_tile=128))
    y3_ref = _ref_forward(x3, blk3.weight, blk3.bias, blk3.gamma, blk3.beta,
                          blk3.running_mean, blk3.running_var, blk3.eps)
    assert y3.shape == (2, 16, 300)
    assert jnp.allclose(y3, y3_ref, atol=2e-5, rtol=2e-5), \
        f"case3 mismatch: {jnp.max(jnp.abs(y3 - y3_ref))}"

    print("KERNEL_OK")
</pallas_src>

<mosaic_0001>
module attributes {stable_mosaic.version = 11 : i64} {
  func.func @_conv_bn_relu_kernel(%arg0: i32, %arg1: i32, %arg2: memref<1x4x128xf32, #tpu.memory_space<vmem>>, %arg3: memref<1x4x128xf32, #tpu.memory_space<vmem>>, %arg4: memref<8x20xf32, #tpu.memory_space<vmem>>, %arg5: memref<8x1xf32, #tpu.memory_space<vmem>>, %arg6: memref<1x8x128xf32, #tpu.memory_space<vmem>>, %arg7: memref<20x128xf32, #tpu.memory_space<vmem>>) attributes {dimension_semantics = [#tpu.dimension_semantics<parallel>, #tpu.dimension_semantics<parallel>], iteration_bounds = array<i64: 2, 1>, scalar_prefetch = 0 : i64, scratch_operands = 1 : i64, tpu.core_type = #tpu.core_type<tc>, window_params = [{transform_indices = @transform_0, window_bounds = array<i64: 1, 4, 128>}, {transform_indices = @transform_1, window_bounds = array<i64: 1, 4, 128>}, {pipeline_mode = #tpu.pipeline_mode<synchronous>, transform_indices = @transform_2, window_bounds = array<i64: 8, 20>}, {pipeline_mode = #tpu.pipeline_mode<synchronous>, transform_indices = @transform_3, window_bounds = array<i64: 8, 1>}, {transform_indices = @transform_4, window_bounds = array<i64: 1, 8, 128>}]} {
    %c0 = arith.constant 0 : index
    %c0_0 = arith.constant 0 : index
    %c0_1 = arith.constant 0 : index
    %0 = vector.load %arg2[%c0, %c0_0, %c0_1] : memref<1x4x128xf32, #tpu.memory_space<vmem>>, vector<1x4x128xf32>
    %1 = vector.shape_cast %0 : vector<1x4x128xf32> to vector<4x128xf32>
    %c0_2 = arith.constant 0 : index
    %c0_3 = arith.constant 0 : index
    %2 = vector.load %arg7[%c0_2, %c0_3] : memref<20x128xf32, #tpu.memory_space<vmem>>, vector<4x128xf32>
    tpu.vector_store %arg7[%c0_2, %c0_3], %1 {strides = array<i32>} : memref<20x128xf32, #tpu.memory_space<vmem>>, vector<4x128xf32>,
    %c0_4 = arith.constant 0 : index
    %c0_5 = arith.constant 0 : index
    %c1 = arith.constant 1 : index
    %3 = vector.load %arg2[%c0_4, %c0_5, %c1] : memref<1x4x128xf32, #tpu.memory_space<vmem>>, vector<1x4x127xf32>
    %4 = vector.shape_cast %3 : vector<1x4x127xf32> to vector<4x127xf32>
    %c4 = arith.constant 4 : index
    %c0_6 = arith.constant 0 : index
    %5 = vector.load %arg7[%c4, %c0_6] : memref<20x128xf32, #tpu.memory_space<vmem>>, vector<4x127xf32>
    tpu.vector_store %arg7[%c4, %c0_6], %4 {strides = array<i32>} : memref<20x128xf32, #tpu.memory_space<vmem>>, vector<4x127xf32>,
    %c0_7 = arith.constant 0 : index
    %c0_8 = arith.constant 0 : index
    %c0_9 = arith.constant 0 : index
    %6 = vector.load %arg3[%c0_7, %c0_8, %c0_9] : memref<1x4x128xf32, #tpu.memory_space<vmem>>, vector<1x4x1xf32>
    %7 = vector.shape_cast %6 : vector<1x4x1xf32> to vector<4x1xf32>
    %c4_10 = arith.constant 4 : index
    %c127 = arith.constant 127 : index
    %8 = vector.load %arg7[%c4_10, %c127] : memref<20x128xf32, #tpu.memory_space<vmem>>, vector<4x1xf32>
    tpu.vector_store %arg7[%c4_10, %c127], %7 {strides = array<i32>} : memref<20x128xf32, #tpu.memory_space<vmem>>, vector<4x1xf32>,
    %c0_11 = arith.constant 0 : index
    %c0_12 = arith.constant 0 : index
    %c2 = arith.constant 2 : index
    %9 = vector.load %arg2[%c0_11, %c0_12, %c2] : memref<1x4x128xf32, #tpu.memory_space<vmem>>, vector<1x4x126xf32>
    %10 = vector.shape_cast %9 : vector<1x4x126xf32> to vector<4x126xf32>
    %c8 = arith.constant 8 : index
    %c0_13 = arith.constant 0 : index
    %11 = vector.load %arg7[%c8, %c0_13] : memref<20x128xf32, #tpu.memory_space<vmem>>, vector<4x126xf32>
    tpu.vector_store %arg7[%c8, %c0_13], %10 {strides = array<i32>} : memref<20x128xf32, #tpu.memory_space<vmem>>, vector<4x126xf32>,
    %c0_14 = arith.constant 0 : index
    %c0_15 = arith.constant 0 : index
    %c0_16 = arith.constant 0 : index
    %12 = vector.load %arg3[%c0_14, %c0_15, %c0_16] : memref<1x4x128xf32, #tpu.memory_space<vmem>>, vector<1x4x2xf32>
    %13 = vector.shape_cast %12 : vector<1x4x2xf32> to vector<4x2xf32>
    %c8_17 = arith.constant 8 : index
    %c126 = arith.constant 126 : index
    %14 = vector.load %arg7[%c8_17, %c126] : memref<20x128xf32, #tpu.memory_space<vmem>>, vector<4x2xf32>
    tpu.vector_store %arg7[%c8_17, %c126], %13 {strides = array<i32>} : memref<20x128xf32, #tpu.memory_space<vmem>>, vector<4x2xf32>,
    %c0_18 = arith.constant 0 : index
    %c0_19 = arith.constant 0 : index
    %c3 = arith.constant 3 : index
    %15 = vector.load %arg2[%c0_18, %c0_19, %c3] : memref<1x4x128xf32, #tpu.memory_space<vmem>>, vector<1x4x125xf32>
    %16 = vector.shape_cast %15 : vector<1x4x125xf32> to vector<4x125xf32>
    %c12 = arith.constant 12 : index
    %c0_20 = arith.constant 0 : index
    %17 = vector.load %arg7[%c12, %c0_20] : memref<20x128xf32, #tpu.memory_space<vmem>>, vector<4x125xf32>
    tpu.vector_store %arg7[%c12, %c0_20], %16 {strides = array<i32>} : memref<20x128xf32, #tpu.memory_space<vmem>>, vector<4x125xf32>,
    %c0_21 = arith.constant 0 : index
    %c0_22 = arith.constant 0 : index
    %c0_23 = arith.constant 0 : index
    %18 = vector.load %arg3[%c0_21, %c0_22, %c0_23] : memref<1x4x128xf32, #tpu.memory_space<vmem>>, vector<1x4x3xf32>
    %19 = vector.shape_cast %18 : vector<1x4x3xf32> to vector<4x3xf32>
    %c12_24 = arith.constant 12 : index
    %c125 = arith.constant 125 : index
    %20 = vector.load %arg7[%c12_24, %c125] : memref<20x128xf32, #tpu.memory_space<vmem>>, vector<4x3xf32>
    tpu.vector_store %arg7[%c12_24, %c125], %19 {strides = array<i32>} : memref<20x128xf32, #tpu.memory_space<vmem>>, vector<4x3xf32>,
    %c0_25 = arith.constant 0 : index
    %c0_26 = arith.constant 0 : index
    %c4_27 = arith.constant 4 : index
    %21 = vector.load %arg2[%c0_25, %c0_26, %c4_27] : memref<1x4x128xf32, #tpu.memory_space<vmem>>, vector<1x4x124xf32>
    %22 = vector.shape_cast %21 : vector<1x4x124xf32> to vector<4x124xf32>
    %c16 = arith.constant 16 : index
    %c0_28 = arith.constant 0 : index
    %23 = vector.load %arg7[%c16, %c0_28] : memref<20x128xf32, #tpu.memory_space<vmem>>, vector<4x124xf32>
    tpu.vector_store %arg7[%c16, %c0_28], %22 {strides = array<i32>} : memref<20x128xf32, #tpu.memory_space<vmem>>, vector<4x124xf32>,
    %c0_29 = arith.constant 0 : index
    %c0_30 = arith.constant 0 : index
    %c0_31 = arith.constant 0 : index
    %24 = vector.load %arg3[%c0_29, %c0_30, %c0_31] : memref<1x4x128xf32, #tpu.memory_space<vmem>>, vector<1x4x4xf32>
    %25 = vector.shape_cast %24 : vector<1x4x4xf32> to vector<4x4xf32>
    %c16_32 = arith.constant 16 : index
    %c124 = arith.constant 124 : index
    %26 = vector.load %arg7[%c16_32, %c124] : memref<20x128xf32, #tpu.memory_space<vmem>>, vector<4x4xf32>
    tpu.vector_store %arg7[%c16_32, %c124], %25 {strides = array<i32>} : memref<20x128xf32, #tpu.memory_space<vmem>>, vector<4x4xf32>,
    %c0_33 = arith.constant 0 : index
    %c0_34 = arith.constant 0 : index
    %27 = vector.load %arg4[%c0_33, %c0_34] : memref<8x20xf32, #tpu.memory_space<vmem>>, vector<8x20xf32>
    %c0_35 = arith.constant 0 : index
    %c0_36 = arith.constant 0 : index
    %28 = vector.load %arg7[%c0_35, %c0_36] : memref<20x128xf32, #tpu.memory_space<vmem>>, vector<20x128xf32>
    %cst = arith.constant dense<0.000000e+00> : vector<8x128xf32>
    %29 = tpu.matmul %27, %28, %cst {dimension_numbers = #tpu.dot_dimension_numbers<[1], [0], [0], [1], [0, 0, 1, 1], [], []>} : vector<8x20xf32>, vector<20x128xf32>, vector<8x128xf32> -> vector<8x128xf32>
    %c0_37 = arith.constant 0 : index
    %c0_38 = arith.constant 0 : index
    %30 = vector.load %arg5[%c0_37, %c0_38] : memref<8x1xf32, #tpu.memory_space<vmem>>, vector<8x1xf32>
    %31 = vector.broadcast %30 : vector<8x1xf32> to vector<8x128xf32>
    %32 = arith.addf %29, %31 : vector<8x128xf32>
    %cst_39 = arith.constant 0.000000e+00 : f32
    %33 = vector.broadcast %cst_39 : f32 to vector<8x128xf32>
    %34 = arith.maximumf %32, %33 : vector<8x128xf32>
    %c0_40 = arith.constant 0 : index
    %c0_41 = arith.constant 0 : index
    %c0_42 = arith.constant 0 : index
    %35 = vector.load %arg6[%c0_40, %c0_41, %c0_42] : memref<1x8x128xf32, #tpu.memory_space<vmem>>, vector<1x8x128xf32>
    %36 = vector.shape_cast %35 : vector<1x8x128xf32> to vector<8x128xf32>
    %37 = vector.shape_cast %34 : vector<8x128xf32> to vector<1x8x128xf32>
    tpu.vector_store %arg6[%c0_40, %c0_41, %c0_42], %37 {strides = array<i32>} : memref<1x8x128xf32, #tpu.memory_space<vmem>>, vector<1x8x128xf32>,
    return
  }
  func.func @transform_0(%arg0: i32, %arg1: i32) -> (i32, i32, i32) {
    %c0_i32 = arith.constant 0 : i32
    %c0_i32_0 = arith.constant 0 : i32
    return %arg0, %c0_i32, %arg1 : i32, i32, i32
  }
  func.func @transform_1(%arg0: i32, %arg1: i32) -> (i32, i32, i32) {
    %c1_i32 = arith.constant 1 : i32
    %0 = arith.addi %arg1, %c1_i32 : i32
    %c1_i32_0 = arith.constant 1 : i32
    %1 = arith.muli %0, %c1_i32_0 : i32
    %c0_i32 = arith.constant 0 : i32
    %c0_i32_1 = arith.constant 0 : i32
    return %arg0, %c0_i32, %1 : i32, i32, i32
  }
  func.func @transform_2(%arg0: i32, %arg1: i32) -> (i32, i32) {
    %c0_i32 = arith.constant 0 : i32
    %c0_i32_0 = arith.constant 0 : i32
    %c0_i32_1 = arith.constant 0 : i32
    return %c0_i32, %c0_i32_0 : i32, i32
  }
  func.func @transform_3(%arg0: i32, %arg1: i32) -> (i32, i32) {
    %c0_i32 = arith.constant 0 : i32
    %c0_i32_0 = arith.constant 0 : i32
    %c0_i32_1 = arith.constant 0 : i32
    return %c0_i32, %c0_i32_0 : i32, i32
  }
  func.func @transform_4(%arg0: i32, %arg1: i32) -> (i32, i32, i32) {
    %c0_i32 = arith.constant 0 : i32
    %c0_i32_0 = arith.constant 0 : i32
    return %arg0, %c0_i32, %arg1 : i32, i32, i32
  }
}

</mosaic_0001>

<llo_original>
// kernel: tpu_custom_call.1
$region0: #{tpu_custom_call.1}
  #allocation0 [shape = 'u32[]', space=smem, size = 0x4, offset = 0x4, fixed_abs, tag = 'smem constant byte address 0x4 - core index']
  #allocation1 [shape = 'u32[72,128]{1,0:T(1,128)}', space=vmem, size = 0x9000, scoped, tag = 'internal scratch']
  #allocation2 [shape = 'f32[20,128]{1,0:T(8,128)}', space=vmem, size = 0x3000, scoped, tag = 'scratch operand']
  %s0 = inlined_call_operand.hbm [shape: f32[2,4,256], index: 0, kind: input, shape index: {}]
  %s1 = inlined_call_operand.hbm [shape: f32[2,4,256], index: 1, kind: input, shape index: {}]
  %s2 = inlined_call_operand.vmem [shape: f32[8,20], index: 2, kind: input, shape index: {}]
  %s3 = inlined_call_operand.vmem [shape: f32[8,1], index: 3, kind: input, shape index: {}]
  %s4 = inlined_call_operand.hbm [shape: f32[2,8,128], index: 4, kind: output, shape index: {}]
  %s5 = sld [smem:[#allocation0]]
  $region57: #{tpu_custom_call.1} parent=0
    _
  %s7 = ssub.s32 1, %s5
  %s8 = scalar_select 0, %s7, %s5
  $region1: #{tpu_custom_call.1} parent=0
    #allocation3 [shape = 'u8[4096]{0}', space=vmem, size = 0x1000, scoped, tag = 'input window, operand 0']
    #allocation4 [shape = 's32[2]{0}', space=sflag, size = 0x8, scoped, tag = 'scoped memory for tpu_custom_call.1']
    #allocation5 [shape = 's32[2]{0}', space=sflag, size = 0x8, scoped, tag = 'scoped memory for tpu_custom_call.1']
    #allocation6 [shape = 'u8[4096]{0}', space=vmem, size = 0x1000, scoped, tag = 'input window, operand 1']
    #allocation7 [shape = 's32[2]{0}', space=sflag, size = 0x8, scoped, tag = 'scoped memory for tpu_custom_call.1']
    #allocation8 [shape = 'u8[8192]{0}', space=vmem, size = 0x2000, scoped, tag = 'output window, operand 0']
    %9 = vsyncpa [#allocation4], 0
    %s10 = scalar_lea.sflag [#allocation4], 1
    %11 = vsyncpa %s10, 0
    %12 = vsyncpa [#allocation7], 0
    %s13 = scalar_lea.sflag [#allocation7], 1
    %14 = vsyncpa %s13, 0
    %15 = vsyncpa [#allocation5], 0
    %s16 = scalar_lea.sflag [#allocation5], 1
    %17 = vsyncpa %s16, 0
    loop: start=0, step=1, limit=4
    $region2: #{tpu_custom_call.1} parent=1 // loop_pre_header
      _
    $region3: #{tpu_custom_call.1} parent=1 // loop_header
      %s19 = sphi 0, %s23
      %p20 = scmp.ge.s32.totalorder %s19, 4
      %s26 = sphi 0, %s38
      %s27 = sphi 0, %s34
      %s28 = sphi 0, %s26
      %s29 = sphi 0, %s27
      %s30 = sphi 0, %s28
      %s31 = sphi 0, %s29
      %s43 = sphi 0, %s45
      %s46 = sphi 0, %s43
      %s47 = sphi 0, %s46
      %s63 = sphi 0, %s47
      %s73 = sphi 0, %s75
      %s76 = sphi 0, %s73
      %s77 = sphi 0, %s76
      %s93 = sphi 0, %s77
      %s97 = sphi 0, %s97
      %s99 = sphi 0, %s97
      %s100 = sphi 0, %s99
      %s114 = sphi 0, %s100
      %s118 = sphi 0, %s118
      %s120 = sphi 0, %s118
      %s121 = sphi 0, %s120
      %s135 = sphi 0, %s121
      %s143 = sphi 0, %s145
      %s146 = sphi 0, %s143
      %s147 = sphi 0, %s146
      %s163 = sphi 0, %s147
    $region4: #{tpu_custom_call.1} parent=1 // loop_header_branch
      %22 = sbr.rel (%p20) target = $region8
    $region5: #{tpu_custom_call.1} parent=1 // loop_body
      %s24 = ssub.s32 %s19, 1
      %s25 = ssub.s32 %s19, 2
      %s32 = sadd.s32 1, %s27
      %p33 = scmp.ge.s32.totalorder %s32, 1
      %s34 = scalar_select %p33, 0, %s32
      %s35 = sadd.s32 1, %s26
      %s36 = scalar_select %p33, %s35, %s26
      %p37 = scmp.ge.s32.totalorder %s36, 2
      %s38 = scalar_select %p37, 0, %s36
      %s39 = ssub.s32 %s26, %s38
      %s40 = ssub.s32 %s27, %s34
      %s41 = sor.u32 %s39, %s40
      %p42 = scmp.eq.s32.totalorder %s41, 0
      %s44 = sadd.s32 %s43, 1
      %s45 = scalar_select %p42, %s43, %s44
      %p48 = pneg %p42
      %p49 = scmp.eq.s32.totalorder %s19, 1
      %p50 = por %p48, %p49
      %p51 = scmp.ne.s32.totalorder %s43, %s46
      %p52 = scmp.eq.s32.totalorder %s19, 0
      %p53 = por %p51, %p52
      %p54 = scmp.ne.s32.totalorder %s43, %s46
      %p55 = scmp.eq.s32.totalorder %s24, 1
      %p56 = por %p54, %p55
      %p57 = scmp.ne.s32.totalorder %s46, %s47
      %p58 = scmp.eq.s32.totalorder %s24, 0
      %p59 = por %p57, %p58
      %p60 = scmp.ne.s32.totalorder %s46, %s47
      %p61 = scmp.eq.s32.totalorder %s25, 1
      %p62 = por %p60, %p61
      %p64 = scmp.ne.s32.totalorder %s47, %s63
      %p65 = scmp.eq.s32.totalorder %s25, 0
      %p66 = por %p64, %p65
      %s67 = sadd.s32 %s27, 1
      %s68 = sadd.s32 %s34, 1
      %s69 = ssub.s32 %s26, %s38
      %s70 = ssub.s32 %s67, %s68
      %s71 = sor.u32 %s69, %s70
      %p72 = scmp.eq.s32.totalorder %s71, 0
      %s74 = sadd.s32 %s73, 1
      %s75 = scalar_select %p72, %s73, %s74
      %p78 = pneg %p72
      %p79 = scmp.eq.s32.totalorder %s19, 1
      %p80 = por %p78, %p79
      %p81 = scmp.ne.s32.totalorder %s73, %s76
      %p82 = scmp.eq.s32.totalorder %s19, 0
      %p83 = por %p81, %p82
      %p84 = scmp.ne.s32.totalorder %s73, %s76
      %p85 = scmp.eq.s32.totalorder %s24, 1
      %p86 = por %p84, %p85
      %p87 = scmp.ne.s32.totalorder %s76, %s77
      %p88 = scmp.eq.s32.totalorder %s24, 0
      %p89 = por %p87, %p88
      %p90 = scmp.ne.s32.totalorder %s76, %s77
      %p91 = scmp.eq.s32.totalorder %s25, 1
      %p92 = por %p90, %p91
      %p94 = scmp.ne.s32.totalorder %s77, %s93
      %p95 = scmp.eq.s32.totalorder %s25, 0
      %p96 = por %p94, %p95
      %s98 = sadd.s32 %s97, 1
      %p101 = scmp.eq.s32.totalorder %s19, 1
      %p102 = scmp.ne.s32.totalorder %s97, %s99
      %p103 = scmp.eq.s32.totalorder %s19, 0
      %p104 = por %p102, %p103
      %p105 = scmp.ne.s32.totalorder %s97, %s99
      %p106 = scmp.eq.s32.totalorder %s24, 1
      %p107 = por %p105, %p106
      %p108 = scmp.ne.s32.totalorder %s99, %s100
      %p109 = scmp.eq.s32.totalorder %s24, 0
      %p110 = por %p108, %p109
      %p111 = scmp.ne.s32.totalorder %s99, %s100
      %p112 = scmp.eq.s32.totalorder %s25, 1
      %p113 = por %p111, %p112
      %p115 = scmp.ne.s32.totalorder %s100, %s114
      %p116 = scmp.eq.s32.totalorder %s25, 0
      %p117 = por %p115, %p116
      %s119 = sadd.s32 %s118, 1
      %p122 = scmp.eq.s32.totalorder %s19, 1
      %p123 = scmp.ne.s32.totalorder %s118, %s120
      %p124 = scmp.eq.s32.totalorder %s19, 0
      %p125 = por %p123, %p124
      %p126 = scmp.ne.s32.totalorder %s118, %s120
      %p127 = scmp.eq.s32.totalorder %s24, 1
      %p128 = por %p126, %p127
      %p129 = scmp.ne.s32.totalorder %s120, %s121
      %p130 = scmp.eq.s32.totalorder %s24, 0
      %p131 = por %p129, %p130
      %p132 = scmp.ne.s32.totalorder %s120, %s121
      %p133 = scmp.eq.s32.totalorder %s25, 1
      %p134 = por %p132, %p133
      %p136 = scmp.ne.s32.totalorder %s121, %s135
      %p137 = scmp.eq.s32.totalorder %s25, 0
      %p138 = por %p136, %p137
      %s139 = ssub.s32 %s26, %s38
      %s140 = ssub.s32 %s27, %s34
      %s141 = sor.u32 %s139, %s140
      %p142 = scmp.eq.s32.totalorder %s141, 0
      %s144 = sadd.s32 %s143, 1
      %s145 = scalar_select %p142, %s143, %s144
      %p148 = pneg %p142
      %p149 = scmp.eq.s32.totalorder %s19, 1
      %p150 = por %p148, %p149
      %p151 = scmp.ne.s32.totalorder %s143, %s146
      %p152 = scmp.eq.s32.totalorder %s19, 0
      %p153 = por %p151, %p152
      %p154 = scmp.ne.s32.totalorder %s143, %s146
      %p155 = scmp.eq.s32.totalorder %s24, 1
      %p156 = por %p154, %p155
      %p157 = scmp.ne.s32.totalorder %s146, %s147
      %p158 = scmp.eq.s32.totalorder %s24, 0
      %p159 = por %p157, %p158
      %p160 = scmp.ne.s32.totalorder %s146, %s147
      %p161 = scmp.eq.s32.totalorder %s25, 1
      %p162 = por %p160, %p161
      %p164 = scmp.ne.s32.totalorder %s147, %s163
      %p165 = scmp.eq.s32.totalorder %s25, 0
      %p166 = por %p164, %p165
      %p167 = scmp.le.s32.totalorder 1, %s19
      %p168 = scmp.lt.s32.totalorder %s19, 3
      %p169 = pnand %p167, %p168
      %p170 = pneg %p169
      // Predicated region
      $region9: #{tpu_custom_call.1} parent=5 // pred_check
        _
      $region10: #{tpu_custom_call.1} parent=5 // pred_check_branch
        %172 = sbr.rel (%p169) target = $region12
      $region11: #{tpu_custom_call.1} parent=5 // pred_region
        %s173 = ssub.s32 %s19, 1
        // Predicated region
        $region13: #{tpu_custom_call.1} parent=11 // pred_check
          %p174 = pneg %p110
        $region14: #{tpu_custom_call.1} parent=11 // pred_check_branch
          %176 = sbr.rel (%p174) target = $region16
        $region15: #{tpu_custom_call.1} parent=11 // pred_region
          _
        $region16: #{tpu_custom_call.1} parent=11 // pred_fallthru
          _
        // Predicated region
        $region17: #{tpu_custom_call.1} parent=11 // pred_check
          %p177 = pneg %p131
        $region18: #{tpu_custom_call.1} parent=11 // pred_check_branch
          %179 = sbr.rel (%p177) target = $region20
        $region19: #{tpu_custom_call.1} parent=11 // pred_region
          _
        $region20: #{tpu_custom_call.1} parent=11 // pred_fallthru
          _
      $region12: #{tpu_custom_call.1} parent=5 // pred_fallthru
        _
      %p180 = scmp.lt.s32.totalorder %s19, 2
      // Predicated region
      $region21: #{tpu_custom_call.1} parent=5 // pred_check
        %p181 = pneg %p180
      $region22: #{tpu_custom_call.1} parent=5 // pred_check_branch
        %183 = sbr.rel (%p181) target = $region24
      $region23: #{tpu_custom_call.1} parent=5 // pred_region
        // Predicated region
        $region25: #{tpu_custom_call.1} parent=23 // pred_check
          %p184 = pneg %p53
        $region26: #{tpu_custom_call.1} parent=23 // pred_check_branch
          %186 = sbr.rel (%p184) target = $region28
        $region27: #{tpu_custom_call.1} parent=23 // pred_region
          %s187 = sand.u32 %s43, 1
          %s188 = scalar_lea.sflag [#allocation4], %s187
          %s189 = sand.u32 %s43, 1
          %s190 = smul.addr %s189, 4
          %s191 = scalar_lea.vmem [#allocation3], %s190
          %193 = vsyncadd %s188, 0
          %s194 = smul.addr %s26, 2
          %s195 = sadd.s32 %s27, %s194
          %s196 = smul.addr %s195, 4
          %s197 = scalar_lea.hbm %s0, %s196
          %s199 = sshll.u32 %s197, 4
          %s200 = int_to_ptr.hbm [resolvable:$true] %s199
          %s201 = sshll.u32 %s191, 4
          %s202 = int_to_ptr.vmem [resolvable:$true] %s201
          %204 = dma.hbm_to_vmem [thread:$0]  %s200, 64, %s202, %s188
        $region28: #{tpu_custom_call.1} parent=23 // pred_fallthru
          _
        // Predicated region
        $region29: #{tpu_custom_call.1} parent=23 // pred_check
          %p205 = pneg %p83
        $region30: #{tpu_custom_call.1} parent=23 // pred_check_branch
          %207 = sbr.rel (%p205) target = $region32
        $region31: #{tpu_custom_call.1} parent=23 // pred_region
          %s208 = sand.u32 %s73, 1
          %s209 = scalar_lea.sflag [#allocation7], %s208
          %s210 = sand.u32 %s73, 1
          %s211 = smul.addr %s210, 4
          %s212 = scalar_lea.vmem [#allocation6], %s211
          %s213 = sadd.s32 %s27, 1
          %215 = vsyncadd %s209, 0
          %s216 = smul.addr %s26, 2
          %s217 = sadd.s32 %s213, %s216
          %s218 = smul.addr %s217, 4
          %s219 = scalar_lea.hbm %s1, %s218
          %s221 = sshll.u32 %s219, 4
          %s222 = int_to_ptr.hbm [resolvable:$true] %s221
          %s223 = sshll.u32 %s212, 4
          %s224 = int_to_ptr.vmem [resolvable:$true] %s223
          %226 = dma.hbm_to_vmem [thread:$0]  %s222, 64, %s224, %s209
        $region32: #{tpu_custom_call.1} parent=23 // pred_fallthru
          _
      $region24: #{tpu_custom_call.1} parent=5 // pred_fallthru
        _
      %p227 = scmp.le.s32.totalorder 1, %s19
      %p228 = scmp.lt.s32.totalorder %s19, 3
      %p229 = pnand %p227, %p228
      %p230 = pneg %p229
      // Predicated region
      $region33: #{tpu_custom_call.1} parent=5 // pred_check
        _
      $region34: #{tpu_custom_call.1} parent=5 // pred_check_branch
        %232 = sbr.rel (%p229) target = $region36
      $region35: #{tpu_custom_call.1} parent=5 // pred_region
        %s233 = ssub.s32 %s19, 1
        %s234 = sand.u32 %s46, 1
        %s235 = scalar_lea.sflag [#allocation4], %s234
        %s236 = sand.u32 %s46, 1
        %s237 = smul.addr %s236, 4
        %s238 = scalar_lea.vmem [#allocation3], %s237
        // Predicated region
        $region37: #{tpu_custom_call.1} parent=35 // pred_check
          %p239 = pneg %p59
        $region38: #{tpu_custom_call.1} parent=35 // pred_check_branch
          %241 = sbr.rel (%p239) target = $region40
        $region39: #{tpu_custom_call.1} parent=35 // pred_region
          %243 = dma.done %s235, 64
        $region40: #{tpu_custom_call.1} parent=35 // pred_fallthru
          _
        %s244 = sand.u32 %s76, 1
        %s245 = scalar_lea.sflag [#allocation7], %s244
        %s246 = sand.u32 %s76, 1
        %s247 = smul.addr %s246, 4
        %s248 = scalar_lea.vmem [#allocation6], %s247
        // Predicated region
        $region41: #{tpu_custom_call.1} parent=35 // pred_check
          %p249 = pneg %p89
        $region42: #{tpu_custom_call.1} parent=35 // pred_check_branch
          %251 = sbr.rel (%p249) target = $region44
        $region43: #{tpu_custom_call.1} parent=35 // pred_region
          %253 = dma.done %s245, 64
        $region44: #{tpu_custom_call.1} parent=35 // pred_fallthru
          _
        %s254 = sand.u32 %s46, 1
        %s255 = scalar_lea.sflag [#allocation4], %s254
        %s256 = sand.u32 %s46, 1
        %s257 = smul.addr %s256, 4
        %s258 = scalar_lea.vmem [#allocation3], %s257
        %p259 = pneg %p59
        %p260 = pneg %p56
        %s261 = sand.u32 %s76, 1
        %s262 = scalar_lea.sflag [#allocation7], %s261
        %s263 = sand.u32 %s76, 1
        %s264 = smul.addr %s263, 4
        %s265 = scalar_lea.vmem [#allocation6], %s264
        %p266 = pneg %p89
        %p267 = pneg %p86
        %p268 = pneg %p110
        %p269 = pneg %p107
        %p270 = pneg %p131
        %p271 = pneg %p128
        %p272 = pneg %p159
        %p273 = pneg %p156
        %s274 = sand.u32 %s146, 1
        %s275 = scalar_lea.sflag [#allocation5], %s274
        %s276 = sand.u32 %s146, 1
        %s277 = smul.addr %s276, 8
        %s278 = scalar_lea.vmem [#allocation8], %s277
        %s279 = sadd.s32 %s29, 1
        %v280 = vld [vmem:[%s238] sm:$0xf]
        %281 = vst [vmem:[#allocation2] sm:$0xf] %v280
        %v282 = vld [vmem:[%s238] sm:$0xf]
        %284 = vrot.lane.b32.xlu0 %v282, 127
        %v285 = vpop.permute.xlu0 %284
        %vm287 = vcmask 1035264
        %288 = vst.msk [vmem:[#allocation2 + $0x4] sm:$0xf] %vm287, %v285
        %v289 = vld [vmem:[%s248] sm:$0xf]
        %291 = vrot.lane.b32.xlu0 %v289, 127
        %v292 = vpop.permute.xlu0 %291
        %vm294 = vcmask 1044472
        %295 = vst.msk [vmem:[#allocation2 + $0x4] sm:$0xf] %vm294, %v292
        %v296 = vld [vmem:[%s238] sm:$0xf]
        %298 = vrot.lane.b32.xlu0 %v296, 126
        %v299 = vpop.permute.xlu0 %298
        %vm301 = vcmask 1027072
        %302 = vst.msk [vmem:[#allocation2 + $0x8] sm:$0xf] %vm301, %v299
        %v303 = vld [vmem:[%s248] sm:$0xf]
        %305 = vrot.lane.b32.xlu0 %v303, 126
        %v306 = vpop.permute.xlu0 %305
        %vm308 = vcmask 1044464
        %309 = vst.msk [vmem:[#allocation2 + $0x8] sm:$0xf] %vm308, %v306
        %v310 = vld [vmem:[%s238] sm:$0xf]
        %312 = vrot.lane.b32.xlu0 %v310, 125
        %v313 = vpop.permute.xlu0 %312
        %vm315 = vcmask 1018880
        %316 = vst.msk [vmem:[#allocation2 + $0xc] sm:$0xf] %vm315, %v313
        %v317 = vld [vmem:[%s248] sm:$0xf]
        %319 = vrot.lane.b32.xlu0 %v317, 125
        %v320 = vpop.permute.xlu0 %319
        %vm322 = vcmask 1044456
        %323 = vst.msk [vmem:[#allocation2 + $0xc] sm:$0xf] %vm322, %v320
        %v324 = vld [vmem:[%s238] sm:$0xf]
        %326 = vrot.lane.b32.xlu0 %v324, 124
        %v327 = vpop.permute.xlu0 %326
        %vm329 = vcmask 1010688
        %330 = vst.msk [vmem:[#allocation2 + $0x10] sm:$0xf] %vm329, %v327
        %v331 = vld [vmem:[%s248] sm:$0xf]
        %333 = vrot.lane.b32.xlu0 %v331, 124
        %v334 = vpop.permute.xlu0 %333
        %vm336 = vcmask 1044448
        %337 = vst.msk [vmem:[#allocation2 + $0x10] sm:$0xf] %vm336, %v334
        %v338 = vld [vmem:[%s2] sm:$0xff]
        %v339 = vld [vmem:[#allocation2] sm:$0xff]
        %v340 = vld [vmem:[#allocation2 + $0x8] sm:$0xff]
        %v341 = vld [vmem:[#allocation2 + $0x10] sm:$0xf]
        %v342 = vld [vmem:[%s3] sm:$0xff]
        %344 = vset.pattern.permute.xlu0 0
        %345 = vperm.xlu0 %344, %v342
        %v346 = vpop.permute.xlu0 %345
        %vm348 = vcmask 162816
        %v350 = vsel %vm348, %v338, 0
        %vm352 = vcmask 1043456
        %v354 = vsel %vm352, %v341, 0
        %356 = vmatpush.msra.mxu0 0.0
        %357 = vmatpush.msra.mxu0 0.0
        %358 = vmatpush.msra.mxu0 0.0
        %359 = vmatpush.msra.mxu0 0.0
        %360 = vmatpush.msra.mxu0 0.0
        %361 = vmatpush.msra.mxu0 0.0
        %362 = vmatpush.msra.mxu0 0.0
        %363 = vmatpush.msra.mxu0 0.0
        %364 = vmatpush.msra.mxu0 0.0
        %365 = vmatpush.msra.mxu0 0.0
        %366 = vmatpush.msra.mxu0 0.0
        %367 = vmatpush.msra.mxu0 0.0
        %368 = vmatpush.msra.mxu0 0.0
        %369 = vmatpush.msra.mxu0 %v354
        %370 = vmatpush.msra.mxu0 %v340
        %371 = vmatpush.msra.mxu0 %v339
        %372 = vmatmul.f32.gmra.mxu0 %v350
        %v373 = vpop.f32.mrf.mxu0
        %v374 = vadd.f32 %v346, %v373
        %375 = vdwg.mxu0
        %v376 = vmax.f32 %v374, 0.0
        %377 = vst [vmem:[%s278] sm:$0xff] %v376
        %s378 = sand.u32 %s146, 1
        %s379 = scalar_lea.sflag [#allocation5], %s378
        %s380 = sand.u32 %s146, 1
        %s381 = smul.addr %s380, 8
        %s382 = scalar_lea.vmem [#allocation8], %s381
        // Predicated region
        $region45: #{tpu_custom_call.1} parent=35 // pred_check
          %p383 = pneg %p156
        $region46: #{tpu_custom_call.1} parent=35 // pred_check_branch
          %385 = sbr.rel (%p383) target = $region48
        $region47: #{tpu_custom_call.1} parent=35 // pred_region
          %387 = vsyncadd %s379, 0
          %s388 = sadd.s32 %s29, %s28
          %s389 = smul.addr %s388, 8
          %s390 = scalar_lea.hbm %s4, %s389
          %s392 = sshll.u32 %s382, 4
          %s393 = int_to_ptr.vmem [resolvable:$true] %s392
          %s394 = sshll.u32 %s390, 4
          %s395 = int_to_ptr.hbm [resolvable:$true] %s394
          %397 = dma.vmem_to_hbm [thread:$0]  %s393, 128, %s395, %s379
        $region48: #{tpu_custom_call.1} parent=35 // pred_fallthru
          _
      $region36: #{tpu_custom_call.1} parent=5 // pred_fallthru
        _
      %p398 = scmp.le.s32.totalorder 2, %s19
      // Predicated region
      $region49: #{tpu_custom_call.1} parent=5 // pred_check
        %p399 = pneg %p398
      $region50: #{tpu_custom_call.1} parent=5 // pred_check_branch
        %401 = sbr.rel (%p399) target = $region52
      $region51: #{tpu_custom_call.1} parent=5 // pred_region
        %s402 = ssub.s32 %s19, 2
        // Predicated region
        $region53: #{tpu_custom_call.1} parent=51 // pred_check
          %p403 = pneg %p162
        $region54: #{tpu_custom_call.1} parent=51 // pred_check_branch
          %405 = sbr.rel (%p403) target = $region56
        $region55: #{tpu_custom_call.1} parent=51 // pred_region
          %s406 = sand.u32 %s147, 1
          %s407 = scalar_lea.sflag [#allocation5], %s406
          %s408 = sand.u32 %s147, 1
          %s409 = smul.addr %s408, 8
          %s410 = scalar_lea.vmem [#allocation8], %s409
          %412 = dma.done %s407, 128
        $region56: #{tpu_custom_call.1} parent=51 // pred_fallthru
          _
      $region52: #{tpu_custom_call.1} parent=5 // pred_fallthru
        _
    $region6: #{tpu_custom_call.1} parent=1 // loop_footer
      %s23 = sadd.s32 1, %s19
    $region7: #{tpu_custom_call.1} parent=1 // loop_footer_branch
      %18 = sbr.rel target = $region3
    $region8: #{tpu_custom_call.1} parent=1 // loop_exit
      _
    %413 = vsyncpa [#allocation4], 1
    %s414 = scalar_lea.sflag [#allocation4], 1
    %415 = vsyncpa %s414, 1
    %416 = vsyncpa [#allocation7], 1
    %s417 = scalar_lea.sflag [#allocation7], 1
    %418 = vsyncpa %s417, 1
    %419 = vsyncpa [#allocation5], 1
    %s420 = scalar_lea.sflag [#allocation5], 1
    %421 = vsyncpa %s420, 1

</llo_original>
